<compile_context>
chip_gen: v6e
topology: v6e:2x2x1
jax: 0.10.0
libtpu: 0.0.40
codegen_flags: <defaults>
</compile_context>

<pallas_src>
import functools

import jax
import jax.numpy as jnp
from jax import lax
from jax.experimental import pallas as pl
from jax.experimental.pallas import tpu as pltpu


def _round_up(x, m):
    return (x + m - 1) // m * m


# exp(+/-_CLAMP)**2 stays finite and non-zero in f32, so the softplus exp-products
# below can never produce inf or NaN.
_CLAMP = 44.0


def _psml_bce_kernel(pred_ref, tgt_ref,                     # VMEM (N, C_TILE) inputs
                     psum_out, pcnt_out, bsum_out,          # VMEM (1,1,1) per-split partials
                     psum_ref, pcnt_ref, bsum_ref,          # VMEM (1, C_TILE) cross-tile partials
                     p32_ref, neg_ref, ep_ref, em_ref,      # VMEM (N, C_TILE) scratch
                     *, n_rows, n_cols, c_tile, tiles_per_split, unroll):
    j = pl.program_id(1)
    last_j = pl.num_programs(1) - 1

    @pl.when(j == 0)
    def _init():
        psum_ref[...] = jnp.zeros_like(psum_ref)
        pcnt_ref[...] = jnp.zeros_like(pcnt_ref)
        bsum_ref[...] = jnp.zeros_like(bsum_ref)

    # Lane-validity mask for the (possibly padded / ragged) class tile.
    col0 = (pl.program_id(0) * tiles_per_split + j) * c_tile
    lane = lax.broadcasted_iota(jnp.int32, (1, c_tile), 1) + col0
    valid = lane < n_cols                                    # (1, C_TILE) bool

    # Cast in-kernel and sanitize padded lanes (their contents are irrelevant).
    p = jnp.where(valid, pred_ref[...].astype(jnp.float32), 0.0)
    t = jnp.where(valid, tgt_ref[...].astype(jnp.float32), 0.0)
    neg = 1.0 - t
    p32_ref[...] = p
    neg_ref[...] = neg

    # --- BCE with logits (stable form), kept as per-lane partial sums.
    bce = jnp.maximum(p, 0.0) - p * t + jnp.log1p(jnp.exp(-jnp.abs(p)))
    bce = jnp.where(valid, bce, 0.0)
    bsum_ref[...] += jnp.sum(bce, axis=0, keepdims=True)

    # --- (pos, neg) pair count per class; padded lanes have pos_c == 0.
    pos_c = jnp.sum(t, axis=0, keepdims=True)
    neg_c = jnp.sum(neg, axis=0, keepdims=True)
    pcnt_ref[...] += pos_c * neg_c

    # --- exp(+/-clip(p)) precompute: the O(N^2 * C) loop then needs one EUP log/pair.
    pc = jnp.clip(p, -_CLAMP, _CLAMP)
    ep = jnp.exp(pc)
    em = jnp.exp(-pc)
    ep_ref[...] = ep
    em_ref[...] = em

    def body(i, acc):
        p_i = p32_ref[pl.ds(i, 1), :]             # (1, C_TILE)
        ep_i = ep_ref[pl.ds(i, 1), :]
        em_i = em_ref[pl.ds(i, 1), :]
        t_i = 1.0 - neg_ref[pl.ds(i, 1), :]
        d = p - p_i                               # unclipped -> exact linear term
        z = jnp.minimum(ep * em_i, em * ep_i)     # ~= exp(-|d|), always finite
        sp = jnp.maximum(d, 0.0) + jnp.log1p(z)   # softplus(p_j - p_i)
        col = jnp.sum(neg * sp, axis=0, keepdims=True)   # XLU sublane reduce
        return acc + t_i * col                    # (1, C_TILE) register carry

    acc = lax.fori_loop(0, n_rows, body,
                        jnp.zeros((1, c_tile), jnp.float32), unroll=unroll)
    psum_ref[...] += acc

    @pl.when(j == last_j)
    def _finalize():
        psum_out[...] = jnp.sum(psum_ref[...]).reshape(1, 1, 1)
        pcnt_out[...] = jnp.sum(pcnt_ref[...]).reshape(1, 1, 1)
        bsum_out[...] = jnp.sum(bsum_ref[...]).reshape(1, 1, 1)


def _vmem_capacity_bytes():
    try:
        return int(pltpu.get_tpu_info().vmem_capacity_bytes)
    except Exception:
        return 64 * 1024 * 1024      # conservative fallback (v7x per-core size)


def psml_with_bce(pred, target):
    """pred, target: (N, C) arrays. Returns float32 scalar PSML(mean) + BCE(mean)."""
    n, c = pred.shape

    # Generation-aware class-tile sizing: ~12 live (N, C_TILE) f32-equivalents per
    # step (2 inputs x 2 pipeline buffers, 4 scratch tiles, row-loop temporaries).
    vmem_phys = _vmem_capacity_bytes()
    budget = min(vmem_phys // 2, 48 * 1024 * 1024)
    cap = max(128, budget // (12 * 4 * n) // 128 * 128)
    c_tile = int(min(cap, 2048, _round_up(c, 128)))

    c_pad = _round_up(c, c_tile)
    if c_pad != c:
        # Pad values are irrelevant (in-kernel lane mask); cheap zero pad, no cast.
        pred = jnp.pad(pred, ((0, 0), (0, c_pad - c)))
        target = jnp.pad(target, ((0, 0), (0, c_pad - c)))

    num_tiles = c_pad // c_tile
    n_splits = 2 if (num_tiles % 2 == 0 and num_tiles >= 2) else 1   # v7x 2-TC split
    tiles_per_split = num_tiles // n_splits

    kernel = functools.partial(
        _psml_bce_kernel, n_rows=n, n_cols=c, c_tile=c_tile,
        tiles_per_split=tiles_per_split, unroll=max(1, min(n, 8)))

    part_shape = jax.ShapeDtypeStruct((n_splits, 1, 1), jnp.float32)
    out_spec = pl.BlockSpec((1, 1, 1), lambda s, j: (s, 0, 0))
    in_spec = pl.BlockSpec((n, c_tile), lambda s, j: (0, s * tiles_per_split + j))

    grid_spec = pltpu.PrefetchScalarGridSpec(
        num_scalar_prefetch=0,
        grid=(n_splits, tiles_per_split),
        in_specs=[in_spec, in_spec],
        out_specs=[out_spec, out_spec, out_spec],
        scratch_shapes=[
            pltpu.VMEM((1, c_tile), jnp.float32),   # pairwise-loss per-lane partial
            pltpu.VMEM((1, c_tile), jnp.float32),   # pair-count per-lane partial
            pltpu.VMEM((1, c_tile), jnp.float32),   # BCE per-lane partial
            pltpu.VMEM((n, c_tile), jnp.float32),   # sanitized f32 logits
            pltpu.VMEM((n, c_tile), jnp.float32),   # 1 - target
            pltpu.VMEM((n, c_tile), jnp.float32),   # exp(+clip(p))
            pltpu.VMEM((n, c_tile), jnp.float32),   # exp(-clip(p))
        ],
    )

    in_bytes = jnp.dtype(pred.dtype).itemsize + jnp.dtype(target.dtype).itemsize
    cost = pl.CostEstimate(
        flops=int(9 * n * n * c_pad + 12 * n * c_pad),
        transcendentals=int(n * n * c_pad + 5 * n * c_pad),
        bytes_accessed=int(n * c_pad * in_bytes + 3 * n_splits * 4))

    live = 12 * 4 * n * c_tile
    vmem_limit = int(max(live * 5 // 4, 16 * 1024 * 1024))

    psum, pcnt, bsum = pl.pallas_call(
        kernel,
        out_shape=(part_shape, part_shape, part_shape),
        grid_spec=grid_spec,
        compiler_params=pltpu.CompilerParams(
            dimension_semantics=("parallel", "arbitrary"),
            vmem_limit_bytes=vmem_limit),
        cost_estimate=cost,
    )(pred, target)

    # Combine per-core partials.  Zero (pos, neg) pairs -> 0/0 = NaN, which matches
    # the PyTorch reference (mean over an empty pair set).
    psml = jnp.sum(psum) / jnp.sum(pcnt)
    bce = jnp.sum(bsum) / jnp.float32(n * c)
    return psml + bce


def _reference_loss(pred, target):
    """Pure-JAX reference mirroring the PyTorch module (mean PSML + mean BCE)."""
    p = pred.astype(jnp.float32)
    t = target.astype(jnp.float32)
    d = p[None, :, :] - p[:, None, :]                        # p_j - p_i
    sp = jnp.maximum(d, 0.0) + jnp.log1p(jnp.exp(-jnp.abs(d)))
    mask = t[:, None, :] * (1.0 - t)[None, :, :]             # (pos i, neg j) same class
    psml = jnp.sum(mask * sp) / jnp.sum(mask)
    bce = jnp.mean(jnp.maximum(p, 0.0) - p * t + jnp.log1p(jnp.exp(-jnp.abs(p))))
    return psml + bce


if __name__ == "__main__":
    key = jax.random.PRNGKey(0)
    kp, kt = jax.random.split(key)
    N, C = 8, 16
    pred = jax.random.normal(kp, (N, C), dtype=jnp.float32)
    target = (jax.random.uniform(kt, (N, C)) > 0.5).astype(jnp.float32)
    target = target.at[3, :].set(0.0)   # a row with no positives -> contributes 0 pairs

    out = jax.block_until_ready(psml_with_bce(pred, target))
    ref = _reference_loss(pred, target)
    assert jnp.allclose(out, ref, rtol=1e-4, atol=1e-5), (float(out), float(ref))
    print("KERNEL_OK")
</pallas_src>

<mosaic_0001>
module attributes {stable_mosaic.version = 11 : i64} {
  func.func @_psml_bce_kernel(%arg0: i32, %arg1: i32, %arg2: memref<8x128xf32, #tpu.memory_space<vmem>>, %arg3: memref<8x128xf32, #tpu.memory_space<vmem>>, %arg4: memref<1x1x1xf32, #tpu.memory_space<vmem>>, %arg5: memref<1x1x1xf32, #tpu.memory_space<vmem>>, %arg6: memref<1x1x1xf32, #tpu.memory_space<vmem>>, %arg7: memref<1x128xf32, #tpu.memory_space<vmem>>, %arg8: memref<1x128xf32, #tpu.memory_space<vmem>>, %arg9: memref<1x128xf32, #tpu.memory_space<vmem>>, %arg10: memref<8x128xf32, #tpu.memory_space<vmem>>, %arg11: memref<8x128xf32, #tpu.memory_space<vmem>>, %arg12: memref<8x128xf32, #tpu.memory_space<vmem>>, %arg13: memref<8x128xf32, #tpu.memory_space<vmem>>) attributes {dimension_semantics = [#tpu.dimension_semantics<parallel>, #tpu.dimension_semantics<arbitrary>], iteration_bounds = array<i64: 1, 1>, scalar_prefetch = 0 : i64, scratch_operands = 7 : i64, tpu.core_type = #tpu.core_type<tc>, window_params = [{transform_indices = @transform_0, window_bounds = array<i64: 8, 128>}, {transform_indices = @transform_1, window_bounds = array<i64: 8, 128>}, {transform_indices = @transform_2, window_bounds = array<i64: 1, 1, 1>}, {transform_indices = @transform_3, window_bounds = array<i64: 1, 1, 1>}, {transform_indices = @transform_4, window_bounds = array<i64: 1, 1, 1>}]} {
    %c0_i32 = arith.constant 0 : i32
    %0 = arith.cmpi eq, %arg1, %c0_i32 : i32
    %1 = arith.extui %0 : i1 to i32
    %c0_i32_0 = arith.constant 0 : i32
    %2 = arith.cmpi ne, %1, %c0_i32_0 : i32
    scf.if %2 {
      %cst_96 = arith.constant 0.000000e+00 : f32
      %277 = vector.broadcast %cst_96 : f32 to vector<1x128xf32>
      %c0_97 = arith.constant 0 : index
      %c0_98 = arith.constant 0 : index
      %278 = vector.load %arg7[%c0_97, %c0_98] : memref<1x128xf32, #tpu.memory_space<vmem>>, vector<1x128xf32>
      tpu.vector_store %arg7[%c0_97, %c0_98], %277 {strides = array<i32>} : memref<1x128xf32, #tpu.memory_space<vmem>>, vector<1x128xf32>,
      %cst_99 = arith.constant 0.000000e+00 : f32
      %279 = vector.broadcast %cst_99 : f32 to vector<1x128xf32>
      %c0_100 = arith.constant 0 : index
      %c0_101 = arith.constant 0 : index
      %280 = vector.load %arg8[%c0_100, %c0_101] : memref<1x128xf32, #tpu.memory_space<vmem>>, vector<1x128xf32>
      tpu.vector_store %arg8[%c0_100, %c0_101], %279 {strides = array<i32>} : memref<1x128xf32, #tpu.memory_space<vmem>>, vector<1x128xf32>,
      %cst_102 = arith.constant 0.000000e+00 : f32
      %281 = vector.broadcast %cst_102 : f32 to vector<1x128xf32>
      %c0_103 = arith.constant 0 : index
      %c0_104 = arith.constant 0 : index
      %282 = vector.load %arg9[%c0_103, %c0_104] : memref<1x128xf32, #tpu.memory_space<vmem>>, vector<1x128xf32>
      tpu.vector_store %arg9[%c0_103, %c0_104], %281 {strides = array<i32>} : memref<1x128xf32, #tpu.memory_space<vmem>>, vector<1x128xf32>,
    } else {
    }
    %c1_i32 = arith.constant 1 : i32
    %3 = arith.muli %arg0, %c1_i32 : i32
    %4 = arith.addi %3, %arg1 : i32
    %c128_i32 = arith.constant 128 : i32
    %5 = arith.muli %4, %c128_i32 : i32
    %6 = tpu.iota {dimensions = array<i32: 1>} : vector<1x128xi32>
    %7 = vector.broadcast %5 : i32 to vector<1x128xi32>
    %8 = arith.addi %6, %7 : vector<1x128xi32>
    %c16_i32 = arith.constant 16 : i32
    %9 = vector.broadcast %c16_i32 : i32 to vector<1x128xi32>
    %10 = arith.cmpi slt, %8, %9 : vector<1x128xi32>
    %c0 = arith.constant 0 : index
    %c0_1 = arith.constant 0 : index
    %11 = vector.load %arg2[%c0, %c0_1] : memref<8x128xf32, #tpu.memory_space<vmem>>, vector<8x128xf32>
    %cst = arith.constant 0.000000e+00 : f32
    %12 = vector.shape_cast %10 : vector<1x128xi1> to vector<1x128xi1>
    %13 = vector.broadcast %12 : vector<1x128xi1> to vector<8x128xi1>
    %14 = vector.broadcast %cst : f32 to vector<8x128xf32>
    %15 = arith.select %13, %11, %14 : vector<8x128xi1>, vector<8x128xf32>
    %c0_2 = arith.constant 0 : index
    %c0_3 = arith.constant 0 : index
    %16 = vector.load %arg3[%c0_2, %c0_3] : memref<8x128xf32, #tpu.memory_space<vmem>>, vector<8x128xf32>
    %cst_4 = arith.constant 0.000000e+00 : f32
    %17 = vector.shape_cast %10 : vector<1x128xi1> to vector<1x128xi1>
    %18 = vector.broadcast %17 : vector<1x128xi1> to vector<8x128xi1>
    %19 = vector.broadcast %cst_4 : f32 to vector<8x128xf32>
    %20 = arith.select %18, %16, %19 : vector<8x128xi1>, vector<8x128xf32>
    %cst_5 = arith.constant 1.000000e+00 : f32
    %21 = vector.broadcast %cst_5 : f32 to vector<8x128xf32>
    %22 = arith.subf %21, %20 : vector<8x128xf32>
    %c0_6 = arith.constant 0 : index
    %c0_7 = arith.constant 0 : index
    %23 = vector.load %arg10[%c0_6, %c0_7] : memref<8x128xf32, #tpu.memory_space<vmem>>, vector<8x128xf32>
    tpu.vector_store %arg10[%c0_6, %c0_7], %15 {strides = array<i32>} : memref<8x128xf32, #tpu.memory_space<vmem>>, vector<8x128xf32>,
    %c0_8 = arith.constant 0 : index
    %c0_9 = arith.constant 0 : index
    %24 = vector.load %arg11[%c0_8, %c0_9] : memref<8x128xf32, #tpu.memory_space<vmem>>, vector<8x128xf32>
    tpu.vector_store %arg11[%c0_8, %c0_9], %22 {strides = array<i32>} : memref<8x128xf32, #tpu.memory_space<vmem>>, vector<8x128xf32>,
    %cst_10 = arith.constant 0.000000e+00 : f32
    %25 = vector.broadcast %cst_10 : f32 to vector<8x128xf32>
    %26 = arith.maximumf %15, %25 : vector<8x128xf32>
    %27 = arith.mulf %15, %20 : vector<8x128xf32>
    %28 = arith.subf %26, %27 : vector<8x128xf32>
    %29 = math.absf %15 : vector<8x128xf32>
    %cst_11 = arith.constant 0.000000e+00 : f32
    %30 = vector.broadcast %cst_11 : f32 to vector<8x128xf32>
    %31 = arith.subf %30, %29 : vector<8x128xf32>
    %32 = math.exp %31 : vector<8x128xf32>
    %33 = math.log1p %32 : vector<8x128xf32>
    %34 = arith.addf %28, %33 : vector<8x128xf32>
    %cst_12 = arith.constant 0.000000e+00 : f32
    %35 = vector.shape_cast %10 : vector<1x128xi1> to vector<1x128xi1>
    %36 = vector.broadcast %35 : vector<1x128xi1> to vector<8x128xi1>
    %37 = vector.broadcast %cst_12 : f32 to vector<8x128xf32>
    %38 = arith.select %36, %34, %37 : vector<8x128xi1>, vector<8x128xf32>
    %c0_13 = arith.constant 0 : index
    %c0_14 = arith.constant 0 : index
    %39 = vector.load %arg9[%c0_13, %c0_14] : memref<1x128xf32, #tpu.memory_space<vmem>>, vector<1x128xf32>
    %cst_15 = arith.constant dense<0.000000e+00> : vector<128xf32>
    %40 = vector.multi_reduction <add>, %38, %cst_15 [0] : vector<8x128xf32> to vector<128xf32>
    %41 = vector.shape_cast %40 : vector<128xf32> to vector<1x128xf32>
    %42 = arith.addf %39, %41 : vector<1x128xf32>
    %c0_16 = arith.constant 0 : index
    %c0_17 = arith.constant 0 : index
    %43 = vector.load %arg9[%c0_16, %c0_17] : memref<1x128xf32, #tpu.memory_space<vmem>>, vector<1x128xf32>
    tpu.vector_store %arg9[%c0_16, %c0_17], %42 {strides = array<i32>} : memref<1x128xf32, #tpu.memory_space<vmem>>, vector<1x128xf32>,
    %cst_18 = arith.constant dense<0.000000e+00> : vector<128xf32>
    %44 = vector.multi_reduction <add>, %20, %cst_18 [0] : vector<8x128xf32> to vector<128xf32>
    %45 = vector.shape_cast %44 : vector<128xf32> to vector<1x128xf32>
    %cst_19 = arith.constant dense<0.000000e+00> : vector<128xf32>
    %46 = vector.multi_reduction <add>, %22, %cst_19 [0] : vector<8x128xf32> to vector<128xf32>
    %47 = vector.shape_cast %46 : vector<128xf32> to vector<1x128xf32>
    %c0_20 = arith.constant 0 : index
    %c0_21 = arith.constant 0 : index
    %48 = vector.load %arg8[%c0_20, %c0_21] : memref<1x128xf32, #tpu.memory_space<vmem>>, vector<1x128xf32>
    %49 = arith.mulf %45, %47 : vector<1x128xf32>
    %50 = arith.addf %48, %49 : vector<1x128xf32>
    %c0_22 = arith.constant 0 : index
    %c0_23 = arith.constant 0 : index
    %51 = vector.load %arg8[%c0_22, %c0_23] : memref<1x128xf32, #tpu.memory_space<vmem>>, vector<1x128xf32>
    tpu.vector_store %arg8[%c0_22, %c0_23], %50 {strides = array<i32>} : memref<1x128xf32, #tpu.memory_space<vmem>>, vector<1x128xf32>,
    %cst_24 = arith.constant -4.400000e+01 : f32
    %cst_25 = arith.constant 4.400000e+01 : f32
    %52 = vector.broadcast %cst_24 : f32 to vector<8x128xf32>
    %53 = arith.maximumf %52, %15 : vector<8x128xf32>
    %54 = vector.broadcast %cst_25 : f32 to vector<8x128xf32>
    %55 = arith.minimumf %54, %53 : vector<8x128xf32>
    %56 = math.exp %55 : vector<8x128xf32>
    %cst_26 = arith.constant 0.000000e+00 : f32
    %57 = vector.broadcast %cst_26 : f32 to vector<8x128xf32>
    %58 = arith.subf %57, %55 : vector<8x128xf32>
    %59 = math.exp %58 : vector<8x128xf32>
    %c0_27 = arith.constant 0 : index
    %c0_28 = arith.constant 0 : index
    %60 = vector.load %arg12[%c0_27, %c0_28] : memref<8x128xf32, #tpu.memory_space<vmem>>, vector<8x128xf32>
    tpu.vector_store %arg12[%c0_27, %c0_28], %56 {strides = array<i32>} : memref<8x128xf32, #tpu.memory_space<vmem>>, vector<8x128xf32>,
    %c0_29 = arith.constant 0 : index
    %c0_30 = arith.constant 0 : index
    %61 = vector.load %arg13[%c0_29, %c0_30] : memref<8x128xf32, #tpu.memory_space<vmem>>, vector<8x128xf32>
    tpu.vector_store %arg13[%c0_29, %c0_30], %59 {strides = array<i32>} : memref<8x128xf32, #tpu.memory_space<vmem>>, vector<8x128xf32>,
    %cst_31 = arith.constant 0.000000e+00 : f32
    %62 = vector.broadcast %cst_31 : f32 to vector<1x128xf32>
    %c0_i32_32 = arith.constant 0 : i32
    %63 = arith.index_cast %c0_i32_32 : i32 to index
    %c0_33 = arith.constant 0 : index
    %64 = vector.load %arg10[%63, %c0_33] : memref<8x128xf32, #tpu.memory_space<vmem>>, vector<1x128xf32>
    %65 = arith.index_cast %c0_i32_32 : i32 to index
    %c0_34 = arith.constant 0 : index
    %66 = vector.load %arg12[%65, %c0_34] : memref<8x128xf32, #tpu.memory_space<vmem>>, vector<1x128xf32>
    %67 = arith.index_cast %c0_i32_32 : i32 to index
    %c0_35 = arith.constant 0 : index
    %68 = vector.load %arg13[%67, %c0_35] : memref<8x128xf32, #tpu.memory_space<vmem>>, vector<1x128xf32>
    %69 = arith.index_cast %c0_i32_32 : i32 to index
    %c0_36 = arith.constant 0 : index
    %70 = vector.load %arg11[%69, %c0_36] : memref<8x128xf32, #tpu.memory_space<vmem>>, vector<1x128xf32>
    %cst_37 = arith.constant 1.000000e+00 : f32
    %71 = vector.broadcast %cst_37 : f32 to vector<1x128xf32>
    %72 = arith.subf %71, %70 : vector<1x128xf32>
    %73 = vector.broadcast %64 : vector<1x128xf32> to vector<8x128xf32>
    %74 = arith.subf %15, %73 : vector<8x128xf32>
    %75 = vector.broadcast %68 : vector<1x128xf32> to vector<8x128xf32>
    %76 = arith.mulf %56, %75 : vector<8x128xf32>
    %77 = vector.broadcast %66 : vector<1x128xf32> to vector<8x128xf32>
    %78 = arith.mulf %59, %77 : vector<8x128xf32>
    %79 = arith.minimumf %76, %78 : vector<8x128xf32>
    %cst_38 = arith.constant 0.000000e+00 : f32
    %80 = vector.broadcast %cst_38 : f32 to vector<8x128xf32>
    %81 = arith.maximumf %74, %80 : vector<8x128xf32>
    %82 = math.log1p %79 : vector<8x128xf32>
    %83 = arith.addf %81, %82 : vector<8x128xf32>
    %84 = arith.mulf %22, %83 : vector<8x128xf32>
    %cst_39 = arith.constant dense<0.000000e+00> : vector<128xf32>
    %85 = vector.multi_reduction <add>, %84, %cst_39 [0] : vector<8x128xf32> to vector<128xf32>
    %86 = vector.shape_cast %85 : vector<128xf32> to vector<1x128xf32>
    %87 = arith.mulf %72, %86 : vector<1x128xf32>
    %88 = arith.addf %62, %87 : vector<1x128xf32>
    %c1_i32_40 = arith.constant 1 : i32
    %89 = arith.index_cast %c1_i32_40 : i32 to index
    %c0_41 = arith.constant 0 : index
    %90 = vector.load %arg10[%89, %c0_41] : memref<8x128xf32, #tpu.memory_space<vmem>>, vector<1x128xf32>
    %91 = arith.index_cast %c1_i32_40 : i32 to index
    %c0_42 = arith.constant 0 : index
    %92 = vector.load %arg12[%91, %c0_42] : memref<8x128xf32, #tpu.memory_space<vmem>>, vector<1x128xf32>
    %93 = arith.index_cast %c1_i32_40 : i32 to index
    %c0_43 = arith.constant 0 : index
    %94 = vector.load %arg13[%93, %c0_43] : memref<8x128xf32, #tpu.memory_space<vmem>>, vector<1x128xf32>
    %95 = arith.index_cast %c1_i32_40 : i32 to index
    %c0_44 = arith.constant 0 : index
    %96 = vector.load %arg11[%95, %c0_44] : memref<8x128xf32, #tpu.memory_space<vmem>>, vector<1x128xf32>
    %cst_45 = arith.constant 1.000000e+00 : f32
    %97 = vector.broadcast %cst_45 : f32 to vector<1x128xf32>
    %98 = arith.subf %97, %96 : vector<1x128xf32>
    %99 = vector.broadcast %90 : vector<1x128xf32> to vector<8x128xf32>
    %100 = arith.subf %15, %99 : vector<8x128xf32>
    %101 = vector.broadcast %94 : vector<1x128xf32> to vector<8x128xf32>
    %102 = arith.mulf %56, %101 : vector<8x128xf32>
    %103 = vector.broadcast %92 : vector<1x128xf32> to vector<8x128xf32>
    %104 = arith.mulf %59, %103 : vector<8x128xf32>
    %105 = arith.minimumf %102, %104 : vector<8x128xf32>
    %cst_46 = arith.constant 0.000000e+00 : f32
    %106 = vector.broadcast %cst_46 : f32 to vector<8x128xf32>
    %107 = arith.maximumf %100, %106 : vector<8x128xf32>
    %108 = math.log1p %105 : vector<8x128xf32>
    %109 = arith.addf %107, %108 : vector<8x128xf32>
    %110 = arith.mulf %22, %109 : vector<8x128xf32>
    %cst_47 = arith.constant dense<0.000000e+00> : vector<128xf32>
    %111 = vector.multi_reduction <add>, %110, %cst_47 [0] : vector<8x128xf32> to vector<128xf32>
    %112 = vector.shape_cast %111 : vector<128xf32> to vector<1x128xf32>
    %113 = arith.mulf %98, %112 : vector<1x128xf32>
    %114 = arith.addf %88, %113 : vector<1x128xf32>
    %c2_i32 = arith.constant 2 : i32
    %115 = arith.index_cast %c2_i32 : i32 to index
    %c0_48 = arith.constant 0 : index
    %116 = vector.load %arg10[%115, %c0_48] : memref<8x128xf32, #tpu.memory_space<vmem>>, vector<1x128xf32>
    %117 = arith.index_cast %c2_i32 : i32 to index
    %c0_49 = arith.constant 0 : index
    %118 = vector.load %arg12[%117, %c0_49] : memref<8x128xf32, #tpu.memory_space<vmem>>, vector<1x128xf32>
    %119 = arith.index_cast %c2_i32 : i32 to index
    %c0_50 = arith.constant 0 : index
    %120 = vector.load %arg13[%119, %c0_50] : memref<8x128xf32, #tpu.memory_space<vmem>>, vector<1x128xf32>
    %121 = arith.index_cast %c2_i32 : i32 to index
    %c0_51 = arith.constant 0 : index
    %122 = vector.load %arg11[%121, %c0_51] : memref<8x128xf32, #tpu.memory_space<vmem>>, vector<1x128xf32>
    %cst_52 = arith.constant 1.000000e+00 : f32
    %123 = vector.broadcast %cst_52 : f32 to vector<1x128xf32>
    %124 = arith.subf %123, %122 : vector<1x128xf32>
    %125 = vector.broadcast %116 : vector<1x128xf32> to vector<8x128xf32>
    %126 = arith.subf %15, %125 : vector<8x128xf32>
    %127 = vector.broadcast %120 : vector<1x128xf32> to vector<8x128xf32>
    %128 = arith.mulf %56, %127 : vector<8x128xf32>
    %129 = vector.broadcast %118 : vector<1x128xf32> to vector<8x128xf32>
    %130 = arith.mulf %59, %129 : vector<8x128xf32>
    %131 = arith.minimumf %128, %130 : vector<8x128xf32>
    %cst_53 = arith.constant 0.000000e+00 : f32
    %132 = vector.broadcast %cst_53 : f32 to vector<8x128xf32>
    %133 = arith.maximumf %126, %132 : vector<8x128xf32>
    %134 = math.log1p %131 : vector<8x128xf32>
    %135 = arith.addf %133, %134 : vector<8x128xf32>
    %136 = arith.mulf %22, %135 : vector<8x128xf32>
    %cst_54 = arith.constant dense<0.000000e+00> : vector<128xf32>
    %137 = vector.multi_reduction <add>, %136, %cst_54 [0] : vector<8x128xf32> to vector<128xf32>
    %138 = vector.shape_cast %137 : vector<128xf32> to vector<1x128xf32>
    %139 = arith.mulf %124, %138 : vector<1x128xf32>
    %140 = arith.addf %114, %139 : vector<1x128xf32>
    %c3_i32 = arith.constant 3 : i32
    %141 = arith.index_cast %c3_i32 : i32 to index
    %c0_55 = arith.constant 0 : index
    %142 = vector.load %arg10[%141, %c0_55] : memref<8x128xf32, #tpu.memory_space<vmem>>, vector<1x128xf32>
    %143 = arith.index_cast %c3_i32 : i32 to index
    %c0_56 = arith.constant 0 : index
    %144 = vector.load %arg12[%143, %c0_56] : memref<8x128xf32, #tpu.memory_space<vmem>>, vector<1x128xf32>
    %145 = arith.index_cast %c3_i32 : i32 to index
    %c0_57 = arith.constant 0 : index
    %146 = vector.load %arg13[%145, %c0_57] : memref<8x128xf32, #tpu.memory_space<vmem>>, vector<1x128xf32>
    %147 = arith.index_cast %c3_i32 : i32 to index
    %c0_58 = arith.constant 0 : index
    %148 = vector.load %arg11[%147, %c0_58] : memref<8x128xf32, #tpu.memory_space<vmem>>, vector<1x128xf32>
    %cst_59 = arith.constant 1.000000e+00 : f32
    %149 = vector.broadcast %cst_59 : f32 to vector<1x128xf32>
    %150 = arith.subf %149, %148 : vector<1x128xf32>
    %151 = vector.broadcast %142 : vector<1x128xf32> to vector<8x128xf32>
    %152 = arith.subf %15, %151 : vector<8x128xf32>
    %153 = vector.broadcast %146 : vector<1x128xf32> to vector<8x128xf32>
    %154 = arith.mulf %56, %153 : vector<8x128xf32>
    %155 = vector.broadcast %144 : vector<1x128xf32> to vector<8x128xf32>
    %156 = arith.mulf %59, %155 : vector<8x128xf32>
    %157 = arith.minimumf %154, %156 : vector<8x128xf32>
    %cst_60 = arith.constant 0.000000e+00 : f32
    %158 = vector.broadcast %cst_60 : f32 to vector<8x128xf32>
    %159 = arith.maximumf %152, %158 : vector<8x128xf32>
    %160 = math.log1p %157 : vector<8x128xf32>
    %161 = arith.addf %159, %160 : vector<8x128xf32>
    %162 = arith.mulf %22, %161 : vector<8x128xf32>
    %cst_61 = arith.constant dense<0.000000e+00> : vector<128xf32>
    %163 = vector.multi_reduction <add>, %162, %cst_61 [0] : vector<8x128xf32> to vector<128xf32>
    %164 = vector.shape_cast %163 : vector<128xf32> to vector<1x128xf32>
    %165 = arith.mulf %150, %164 : vector<1x128xf32>
    %166 = arith.addf %140, %165 : vector<1x128xf32>
    %c4_i32 = arith.constant 4 : i32
    %167 = arith.index_cast %c4_i32 : i32 to index
    %c0_62 = arith.constant 0 : index
    %168 = vector.load %arg10[%167, %c0_62] : memref<8x128xf32, #tpu.memory_space<vmem>>, vector<1x128xf32>
    %169 = arith.index_cast %c4_i32 : i32 to index
    %c0_63 = arith.constant 0 : index
    %170 = vector.load %arg12[%169, %c0_63] : memref<8x128xf32, #tpu.memory_space<vmem>>, vector<1x128xf32>
    %171 = arith.index_cast %c4_i32 : i32 to index
    %c0_64 = arith.constant 0 : index
    %172 = vector.load %arg13[%171, %c0_64] : memref<8x128xf32, #tpu.memory_space<vmem>>, vector<1x128xf32>
    %173 = arith.index_cast %c4_i32 : i32 to index
    %c0_65 = arith.constant 0 : index
    %174 = vector.load %arg11[%173, %c0_65] : memref<8x128xf32, #tpu.memory_space<vmem>>, vector<1x128xf32>
    %cst_66 = arith.constant 1.000000e+00 : f32
    %175 = vector.broadcast %cst_66 : f32 to vector<1x128xf32>
    %176 = arith.subf %175, %174 : vector<1x128xf32>
    %177 = vector.broadcast %168 : vector<1x128xf32> to vector<8x128xf32>
    %178 = arith.subf %15, %177 : vector<8x128xf32>
    %179 = vector.broadcast %172 : vector<1x128xf32> to vector<8x128xf32>
    %180 = arith.mulf %56, %179 : vector<8x128xf32>
    %181 = vector.broadcast %170 : vector<1x128xf32> to vector<8x128xf32>
    %182 = arith.mulf %59, %181 : vector<8x128xf32>
    %183 = arith.minimumf %180, %182 : vector<8x128xf32>
    %cst_67 = arith.constant 0.000000e+00 : f32
    %184 = vector.broadcast %cst_67 : f32 to vector<8x128xf32>
    %185 = arith.maximumf %178, %184 : vector<8x128xf32>
    %186 = math.log1p %183 : vector<8x128xf32>
    %187 = arith.addf %185, %186 : vector<8x128xf32>
    %188 = arith.mulf %22, %187 : vector<8x128xf32>
    %cst_68 = arith.constant dense<0.000000e+00> : vector<128xf32>
    %189 = vector.multi_reduction <add>, %188, %cst_68 [0] : vector<8x128xf32> to vector<128xf32>
    %190 = vector.shape_cast %189 : vector<128xf32> to vector<1x128xf32>
    %191 = arith.mulf %176, %190 : vector<1x128xf32>
    %192 = arith.addf %166, %191 : vector<1x128xf32>
    %c5_i32 = arith.constant 5 : i32
    %193 = arith.index_cast %c5_i32 : i32 to index
    %c0_69 = arith.constant 0 : index
    %194 = vector.load %arg10[%193, %c0_69] : memref<8x128xf32, #tpu.memory_space<vmem>>, vector<1x128xf32>
    %195 = arith.index_cast %c5_i32 : i32 to index
    %c0_70 = arith.constant 0 : index
    %196 = vector.load %arg12[%195, %c0_70] : memref<8x128xf32, #tpu.memory_space<vmem>>, vector<1x128xf32>
    %197 = arith.index_cast %c5_i32 : i32 to index
    %c0_71 = arith.constant 0 : index
    %198 = vector.load %arg13[%197, %c0_71] : memref<8x128xf32, #tpu.memory_space<vmem>>, vector<1x128xf32>
    %199 = arith.index_cast %c5_i32 : i32 to index
    %c0_72 = arith.constant 0 : index
    %200 = vector.load %arg11[%199, %c0_72] : memref<8x128xf32, #tpu.memory_space<vmem>>, vector<1x128xf32>
    %cst_73 = arith.constant 1.000000e+00 : f32
    %201 = vector.broadcast %cst_73 : f32 to vector<1x128xf32>
    %202 = arith.subf %201, %200 : vector<1x128xf32>
    %203 = vector.broadcast %194 : vector<1x128xf32> to vector<8x128xf32>
    %204 = arith.subf %15, %203 : vector<8x128xf32>
    %205 = vector.broadcast %198 : vector<1x128xf32> to vector<8x128xf32>
    %206 = arith.mulf %56, %205 : vector<8x128xf32>
    %207 = vector.broadcast %196 : vector<1x128xf32> to vector<8x128xf32>
    %208 = arith.mulf %59, %207 : vector<8x128xf32>
    %209 = arith.minimumf %206, %208 : vector<8x128xf32>
    %cst_74 = arith.constant 0.000000e+00 : f32
    %210 = vector.broadcast %cst_74 : f32 to vector<8x128xf32>
    %211 = arith.maximumf %204, %210 : vector<8x128xf32>
    %212 = math.log1p %209 : vector<8x128xf32>
    %213 = arith.addf %211, %212 : vector<8x128xf32>
    %214 = arith.mulf %22, %213 : vector<8x128xf32>
    %cst_75 = arith.constant dense<0.000000e+00> : vector<128xf32>
    %215 = vector.multi_reduction <add>, %214, %cst_75 [0] : vector<8x128xf32> to vector<128xf32>
    %216 = vector.shape_cast %215 : vector<128xf32> to vector<1x128xf32>
    %217 = arith.mulf %202, %216 : vector<1x128xf32>
    %218 = arith.addf %192, %217 : vector<1x128xf32>
    %c6_i32 = arith.constant 6 : i32
    %219 = arith.index_cast %c6_i32 : i32 to index
    %c0_76 = arith.constant 0 : index
    %220 = vector.load %arg10[%219, %c0_76] : memref<8x128xf32, #tpu.memory_space<vmem>>, vector<1x128xf32>
    %221 = arith.index_cast %c6_i32 : i32 to index
    %c0_77 = arith.constant 0 : index
    %222 = vector.load %arg12[%221, %c0_77] : memref<8x128xf32, #tpu.memory_space<vmem>>, vector<1x128xf32>
    %223 = arith.index_cast %c6_i32 : i32 to index
    %c0_78 = arith.constant 0 : index
    %224 = vector.load %arg13[%223, %c0_78] : memref<8x128xf32, #tpu.memory_space<vmem>>, vector<1x128xf32>
    %225 = arith.index_cast %c6_i32 : i32 to index
    %c0_79 = arith.constant 0 : index
    %226 = vector.load %arg11[%225, %c0_79] : memref<8x128xf32, #tpu.memory_space<vmem>>, vector<1x128xf32>
    %cst_80 = arith.constant 1.000000e+00 : f32
    %227 = vector.broadcast %cst_80 : f32 to vector<1x128xf32>
    %228 = arith.subf %227, %226 : vector<1x128xf32>
    %229 = vector.broadcast %220 : vector<1x128xf32> to vector<8x128xf32>
    %230 = arith.subf %15, %229 : vector<8x128xf32>
    %231 = vector.broadcast %224 : vector<1x128xf32> to vector<8x128xf32>
    %232 = arith.mulf %56, %231 : vector<8x128xf32>
    %233 = vector.broadcast %222 : vector<1x128xf32> to vector<8x128xf32>
    %234 = arith.mulf %59, %233 : vector<8x128xf32>
    %235 = arith.minimumf %232, %234 : vector<8x128xf32>
    %cst_81 = arith.constant 0.000000e+00 : f32
    %236 = vector.broadcast %cst_81 : f32 to vector<8x128xf32>
    %237 = arith.maximumf %230, %236 : vector<8x128xf32>
    %238 = math.log1p %235 : vector<8x128xf32>
    %239 = arith.addf %237, %238 : vector<8x128xf32>
    %240 = arith.mulf %22, %239 : vector<8x128xf32>
    %cst_82 = arith.constant dense<0.000000e+00> : vector<128xf32>
    %241 = vector.multi_reduction <add>, %240, %cst_82 [0] : vector<8x128xf32> to vector<128xf32>
    %242 = vector.shape_cast %241 : vector<128xf32> to vector<1x128xf32>
    %243 = arith.mulf %228, %242 : vector<1x128xf32>
    %244 = arith.addf %218, %243 : vector<1x128xf32>
    %c7_i32 = arith.constant 7 : i32
    %245 = arith.index_cast %c7_i32 : i32 to index
    %c0_83 = arith.constant 0 : index
    %246 = vector.load %arg10[%245, %c0_83] : memref<8x128xf32, #tpu.memory_space<vmem>>, vector<1x128xf32>
    %247 = arith.index_cast %c7_i32 : i32 to index
    %c0_84 = arith.constant 0 : index
    %248 = vector.load %arg12[%247, %c0_84] : memref<8x128xf32, #tpu.memory_space<vmem>>, vector<1x128xf32>
    %249 = arith.index_cast %c7_i32 : i32 to index
    %c0_85 = arith.constant 0 : index
    %250 = vector.load %arg13[%249, %c0_85] : memref<8x128xf32, #tpu.memory_space<vmem>>, vector<1x128xf32>
    %251 = arith.index_cast %c7_i32 : i32 to index
    %c0_86 = arith.constant 0 : index
    %252 = vector.load %arg11[%251, %c0_86] : memref<8x128xf32, #tpu.memory_space<vmem>>, vector<1x128xf32>
    %cst_87 = arith.constant 1.000000e+00 : f32
    %253 = vector.broadcast %cst_87 : f32 to vector<1x128xf32>
    %254 = arith.subf %253, %252 : vector<1x128xf32>
    %255 = vector.broadcast %246 : vector<1x128xf32> to vector<8x128xf32>
    %256 = arith.subf %15, %255 : vector<8x128xf32>
    %257 = vector.broadcast %250 : vector<1x128xf32> to vector<8x128xf32>
    %258 = arith.mulf %56, %257 : vector<8x128xf32>
    %259 = vector.broadcast %248 : vector<1x128xf32> to vector<8x128xf32>
    %260 = arith.mulf %59, %259 : vector<8x128xf32>
    %261 = arith.minimumf %258, %260 : vector<8x128xf32>
    %cst_88 = arith.constant 0.000000e+00 : f32
    %262 = vector.broadcast %cst_88 : f32 to vector<8x128xf32>
    %263 = arith.maximumf %256, %262 : vector<8x128xf32>
    %264 = math.log1p %261 : vector<8x128xf32>
    %265 = arith.addf %263, %264 : vector<8x128xf32>
    %266 = arith.mulf %22, %265 : vector<8x128xf32>
    %cst_89 = arith.constant dense<0.000000e+00> : vector<128xf32>
    %267 = vector.multi_reduction <add>, %266, %cst_89 [0] : vector<8x128xf32> to vector<128xf32>
    %268 = vector.shape_cast %267 : vector<128xf32> to vector<1x128xf32>
    %269 = arith.mulf %254, %268 : vector<1x128xf32>
    %270 = arith.addf %244, %269 : vector<1x128xf32>
    %c8_i32 = arith.constant 8 : i32
    %c0_90 = arith.constant 0 : index
    %c0_91 = arith.constant 0 : index
    %271 = vector.load %arg7[%c0_90, %c0_91] : memref<1x128xf32, #tpu.memory_space<vmem>>, vector<1x128xf32>
    %272 = arith.addf %271, %270 : vector<1x128xf32>
    %c0_92 = arith.constant 0 : index
    %c0_93 = arith.constant 0 : index
    %273 = vector.load %arg7[%c0_92, %c0_93] : memref<1x128xf32, #tpu.memory_space<vmem>>, vector<1x128xf32>
    tpu.vector_store %arg7[%c0_92, %c0_93], %272 {strides = array<i32>} : memref<1x128xf32, #tpu.memory_space<vmem>>, vector<1x128xf32>,
    %c0_i32_94 = arith.constant 0 : i32
    %274 = arith.cmpi eq, %arg1, %c0_i32_94 : i32
    %275 = arith.extui %274 : i1 to i32
    %c0_i32_95 = arith.constant 0 : i32
    %276 = arith.cmpi ne, %275, %c0_i32_95 : i32
    scf.if %276 {
      %c0_96 = arith.constant 0 : index
      %c0_97 = arith.constant 0 : index
      %277 = vector.load %arg7[%c0_96, %c0_97] : memref<1x128xf32, #tpu.memory_space<vmem>>, vector<1x128xf32>
      %278 = vector.shape_cast %277 : vector<1x128xf32> to vector<1x1x128xf32>
      %cst_98 = arith.constant dense<0.000000e+00> : vector<1xf32>
      %279 = vector.multi_reduction <add>, %278, %cst_98 [1, 2] : vector<1x1x128xf32> to vector<1xf32>
      %280 = vector.shape_cast %279 : vector<1xf32> to vector<1x1x1xf32>
      %281 = vector.extract %280[0, 0, 0] : f32 from vector<1x1x1xf32>
      %282 = vector.broadcast %281 : f32 to vector<1x1x1xf32>
      %c0_99 = arith.constant 0 : index
      %c0_100 = arith.constant 0 : index
      %c0_101 = arith.constant 0 : index
      %283 = vector.load %arg4[%c0_99, %c0_100, %c0_101] : memref<1x1x1xf32, #tpu.memory_space<vmem>>, vector<1x1x1xf32>
      tpu.vector_store %arg4[%c0_99, %c0_100, %c0_101], %282 {strides = array<i32>} : memref<1x1x1xf32, #tpu.memory_space<vmem>>, vector<1x1x1xf32>,
      %c0_102 = arith.constant 0 : index
      %c0_103 = arith.constant 0 : index
      %284 = vector.load %arg8[%c0_102, %c0_103] : memref<1x128xf32, #tpu.memory_space<vmem>>, vector<1x128xf32>
      %285 = vector.shape_cast %284 : vector<1x128xf32> to vector<1x1x128xf32>
      %cst_104 = arith.constant dense<0.000000e+00> : vector<1xf32>
      %286 = vector.multi_reduction <add>, %285, %cst_104 [1, 2] : vector<1x1x128xf32> to vector<1xf32>
      %287 = vector.shape_cast %286 : vector<1xf32> to vector<1x1x1xf32>
      %288 = vector.extract %287[0, 0, 0] : f32 from vector<1x1x1xf32>
      %289 = vector.broadcast %288 : f32 to vector<1x1x1xf32>
      %c0_105 = arith.constant 0 : index
      %c0_106 = arith.constant 0 : index
      %c0_107 = arith.constant 0 : index
      %290 = vector.load %arg5[%c0_105, %c0_106, %c0_107] : memref<1x1x1xf32, #tpu.memory_space<vmem>>, vector<1x1x1xf32>
      tpu.vector_store %arg5[%c0_105, %c0_106, %c0_107], %289 {strides = array<i32>} : memref<1x1x1xf32, #tpu.memory_space<vmem>>, vector<1x1x1xf32>,
      %c0_108 = arith.constant 0 : index
      %c0_109 = arith.constant 0 : index
      %291 = vector.load %arg9[%c0_108, %c0_109] : memref<1x128xf32, #tpu.memory_space<vmem>>, vector<1x128xf32>
      %292 = vector.shape_cast %291 : vector<1x128xf32> to vector<1x1x128xf32>
      %cst_110 = arith.constant dense<0.000000e+00> : vector<1xf32>
      %293 = vector.multi_reduction <add>, %292, %cst_110 [1, 2] : vector<1x1x128xf32> to vector<1xf32>
      %294 = vector.shape_cast %293 : vector<1xf32> to vector<1x1x1xf32>
      %295 = vector.extract %294[0, 0, 0] : f32 from vector<1x1x1xf32>
      %296 = vector.broadcast %295 : f32 to vector<1x1x1xf32>
      %c0_111 = arith.constant 0 : index
      %c0_112 = arith.constant 0 : index
      %c0_113 = arith.constant 0 : index
      %297 = vector.load %arg6[%c0_111, %c0_112, %c0_113] : memref<1x1x1xf32, #tpu.memory_space<vmem>>, vector<1x1x1xf32>
      tpu.vector_store %arg6[%c0_111, %c0_112, %c0_113], %296 {strides = array<i32>} : memref<1x1x1xf32, #tpu.memory_space<vmem>>, vector<1x1x1xf32>,
    } else {
    }
    return
  }
  func.func @transform_0(%arg0: i32, %arg1: i32) -> (i32, i32) {
    %c1_i32 = arith.constant 1 : i32
    %0 = arith.muli %arg0, %c1_i32 : i32
    %1 = arith.addi %0, %arg1 : i32
    %c0_i32 = arith.constant 0 : i32
    %c0_i32_0 = arith.constant 0 : i32
    return %c0_i32, %1 : i32, i32
  }
  func.func @transform_1(%arg0: i32, %arg1: i32) -> (i32, i32) {
    %c1_i32 = arith.constant 1 : i32
    %0 = arith.muli %arg0, %c1_i32 : i32
    %1 = arith.addi %0, %arg1 : i32
    %c0_i32 = arith.constant 0 : i32
    %c0_i32_0 = arith.constant 0 : i32
    return %c0_i32, %1 : i32, i32
  }
  func.func @transform_2(%arg0: i32, %arg1: i32) -> (i32, i32, i32) {
    %c0_i32 = arith.constant 0 : i32
    %c0_i32_0 = arith.constant 0 : i32
    %c0_i32_1 = arith.constant 0 : i32
    return %arg0, %c0_i32, %c0_i32_0 : i32, i32, i32
  }
  func.func @transform_3(%arg0: i32, %arg1: i32) -> (i32, i32, i32) {
    %c0_i32 = arith.constant 0 : i32
    %c0_i32_0 = arith.constant 0 : i32
    %c0_i32_1 = arith.constant 0 : i32
    return %arg0, %c0_i32, %c0_i32_0 : i32, i32, i32
  }
  func.func @transform_4(%arg0: i32, %arg1: i32) -> (i32, i32, i32) {
    %c0_i32 = arith.constant 0 : i32
    %c0_i32_0 = arith.constant 0 : i32
    %c0_i32_1 = arith.constant 0 : i32
    return %arg0, %c0_i32, %c0_i32_0 : i32, i32, i32
  }
}

</mosaic_0001>

<llo_original>
// kernel: tpu_custom_call.1
$region0: #{tpu_custom_call.1}
  #allocation0 [shape = 'u32[]', space=smem, size = 0x4, offset = 0x4, fixed_abs, tag = 'smem constant byte address 0x4 - core index']
  #allocation1 [shape = 'u32[144,128]{1,0:T(1,128)}', space=vmem, size = 0x12000, scoped, tag = 'internal scratch']
  #allocation2 [shape = 'f32[1,128]{1,0:T(1,128)}', space=vmem, size = 0x200, scoped, tag = 'scratch operand']
  #allocation3 [shape = 'f32[1,128]{1,0:T(1,128)}', space=vmem, size = 0x200, scoped, tag = 'scratch operand']
  #allocation4 [shape = 'f32[1,128]{1,0:T(1,128)}', space=vmem, size = 0x200, scoped, tag = 'scratch operand']
  #allocation5 [shape = 'f32[8,128]{1,0:T(8,128)}', space=vmem, size = 0x1000, scoped, tag = 'scratch operand']
  #allocation6 [shape = 'f32[8,128]{1,0:T(8,128)}', space=vmem, size = 0x1000, scoped, tag = 'scratch operand']
  #allocation7 [shape = 'f32[8,128]{1,0:T(8,128)}', space=vmem, size = 0x1000, scoped, tag = 'scratch operand']
  #allocation8 [shape = 'f32[8,128]{1,0:T(8,128)}', space=vmem, size = 0x1000, scoped, tag = 'scratch operand']
  %s0 = inlined_call_operand.hbm [shape: f32[8,128], index: 0, kind: input, shape index: {}]
  %s1 = inlined_call_operand.hbm [shape: f32[8,128], index: 1, kind: input, shape index: {}]
  %s2 = inlined_call_operand.hbm [shape: f32[1,1,1], index: 2, kind: output, shape index: {0}]
  %s3 = inlined_call_operand.hbm [shape: f32[1,1,1], index: 3, kind: output, shape index: {1}]
  %s4 = inlined_call_operand.hbm [shape: f32[1,1,1], index: 4, kind: output, shape index: {2}]
  %5 = xla_tuple %s2, %s3, %s4
  %s6 = sld [smem:[#allocation0]]
  $region50: #{tpu_custom_call.1} parent=0
    _
  %s8 = ssub.s32 1, %s6
  %s9 = scalar_select 0, %s8, %s6
  $region1: #{tpu_custom_call.1} parent=0
    #allocation9 [shape = 'u8[4096]{0}', space=vmem, size = 0x1000, scoped, tag = 'input window, operand 0, single buffered']
    #allocation10 [shape = 's32[1]{0}', space=sflag, size = 0x4, scoped, tag = 'scoped memory for tpu_custom_call.1']
    #allocation11 [shape = 's32[1]{0}', space=sflag, size = 0x4, scoped, tag = 'scoped memory for tpu_custom_call.1']
    #allocation12 [shape = 'u8[4096]{0}', space=vmem, size = 0x1000, scoped, tag = 'input window, operand 1, single buffered']
    #allocation13 [shape = 's32[1]{0}', space=sflag, size = 0x4, scoped, tag = 'scoped memory for tpu_custom_call.1']
    #allocation14 [shape = 'u8[512]{0}', space=vmem, size = 0x400, scoped, tag = 'output window, operand 0, single buffered']
    #allocation15 [shape = 'u8[512]{0}', space=vmem, size = 0x400, scoped, tag = 'output window, operand 1, single buffered']
    #allocation16 [shape = 's32[1]{0}', space=sflag, size = 0x4, scoped, tag = 'scoped memory for tpu_custom_call.1']
    #allocation17 [shape = 'u8[512]{0}', space=vmem, size = 0x400, scoped, tag = 'output window, operand 2, single buffered']
    %10 = vsyncpa [#allocation10], 0
    %11 = vsyncpa [#allocation13], 0
    %12 = vsyncpa [#allocation11], 0
    %13 = vsyncpa [#allocation16], 0
    // Predicated region
    $region2: #{tpu_custom_call.1} parent=1 // pred_check
      _
    $region3: #{tpu_custom_call.1} parent=1 // pred_check_branch
      %15 = sbr.rel (0) target = $region5
    $region4: #{tpu_custom_call.1} parent=1 // pred_region
      %s16 = sadd.s32 0, 0
      %s18 = ssub.s32 128, 128
      %19 = vsyncadd [#allocation10], %s18
      %s20 = smul.addr %s16, 128
      %s21 = scalar_lea.hbm %s0, %s20
      %s23 = sshll.u32 [#allocation9], 4
      %s24 = int_to_ptr.vmem [resolvable:$true] %s23
      %26 = dma.hbm_to_vmem [thread:$0]  %s21, 128, %s24, [#allocation10]
    $region5: #{tpu_custom_call.1} parent=1 // pred_fallthru
      _
    // Predicated region
    $region6: #{tpu_custom_call.1} parent=1 // pred_check
      _
    $region7: #{tpu_custom_call.1} parent=1 // pred_check_branch
      %28 = sbr.rel (0) target = $region9
    $region8: #{tpu_custom_call.1} parent=1 // pred_region
      %s29 = sadd.s32 0, 0
      %s31 = ssub.s32 128, 128
      %32 = vsyncadd [#allocation13], %s31
      %s33 = smul.addr %s29, 128
      %s34 = scalar_lea.hbm %s1, %s33
      %s36 = sshll.u32 [#allocation12], 4
      %s37 = int_to_ptr.vmem [resolvable:$true] %s36
      %39 = dma.hbm_to_vmem [thread:$0]  %s34, 128, %s37, [#allocation13]
    $region9: #{tpu_custom_call.1} parent=1 // pred_fallthru
      _
    // Predicated region
    $region10: #{tpu_custom_call.1} parent=1 // pred_check
      _
    $region11: #{tpu_custom_call.1} parent=1 // pred_check_branch
      %41 = sbr.rel (0) target = $region13
    $region12: #{tpu_custom_call.1} parent=1 // pred_region
      %42 = dma.done [#allocation10], 128
    $region13: #{tpu_custom_call.1} parent=1 // pred_fallthru
      _
    // Predicated region
    $region14: #{tpu_custom_call.1} parent=1 // pred_check
      _
    $region15: #{tpu_custom_call.1} parent=1 // pred_check_branch
      %44 = sbr.rel (0) target = $region17
    $region16: #{tpu_custom_call.1} parent=1 // pred_region
      %45 = dma.done [#allocation13], 128
    $region17: #{tpu_custom_call.1} parent=1 // pred_fallthru
      _
    %s46 = sadd.s32 0, 0
    %s47 = sadd.s32 0, 0
    %p48 = scmp.eq.s32.totalorder 0, 0
    // Predicated region
    $region18: #{tpu_custom_call.1} parent=1 // pred_check
      %p49 = pneg %p48
    $region19: #{tpu_custom_call.1} parent=1 // pred_check_branch
      %51 = sbr.rel (%p49) target = $region21
    $region20: #{tpu_custom_call.1} parent=1 // pred_region
      %52 = vst [vmem:[#allocation2] sm:$0x1] 0.0
      %53 = vst [vmem:[#allocation3] sm:$0x1] 0.0
      %54 = vst [vmem:[#allocation4] sm:$0x1] 0.0
    $region21: #{tpu_custom_call.1} parent=1 // pred_fallthru
      _
    %s55 = sadd.s32 0, 0
    %s56 = smul.u32 %s55, 128
    %v57 = vlaneseq
    %v58 = vand.u32 %v57, 127
    %v59 = vstv %s56
    %v60 = vadd.s32 %v58, %v59
    %vm61 = vcmp.lt.s32.totalorder %v60, 16
    %v62 = vld [vmem:[#allocation9] sm:$0xff]
    %v63 = vsel %vm61, 1, 0
    %vm64 = vcmp.eq.s32.totalorder %v63, 1
    %v65 = vsel %vm64, %v62, 0.0
    %v66 = vld [vmem:[#allocation12] sm:$0xff]
    %v67 = vsel %vm64, %v66, 0.0
    %v68 = vsub.f32 1.0, %v67
    %69 = vst [vmem:[#allocation5] sm:$0xff] %v65
    %70 = vst [vmem:[#allocation6] sm:$0xff] %v68
    %v71 = vmax.f32 %v65, 0.0
    %v72 = vmul.f32 %v65, %v67
    %v73 = vsub.f32 %v71, %v72
    %v74 = vand.u32 2147483647, %v65
    %v75 = vsub.f32 0.0, %v74
    %v76 = vmul.f32 %v75, 1.442695
    %v77 = vpow.pop %v76
    %v78 = vadd.f32 %v77, 1.0
    %v79 = vlog2.pop %v78
    %v80 = vmul.f32 %v79, 0.6931472
    %v81 = vmul.f32 -0.5, %v77
    %v82 = vadd.f32 %v81, 1.0
    %v83 = vmul.f32 %v82, %v77
    %v84 = vand.u32 2147483647, %v77
    %vm85 = vcmp.lt.f32.partialorder %v84, 0.0004427343
    %v86 = vsel %vm85, %v83, %v80
    %v87 = vadd.f32 %v73, %v86
    %v88 = vsel %vm64, %v87, 0.0
    %v89 = vld [vmem:[#allocation4] sm:$0x1]
    %v90 = vrot.slane %v88, 4
    %v91 = vadd.f32 %v88, %v90
    %v92 = vrot.slane %v91, 2
    %v93 = vadd.f32 %v91, %v92
    %v94 = vrot.slane %v93, 1
    %v95 = vadd.f32 %v93, %v94
    %v96 = vadd.f32 %v89, %v95
    %97 = vst [vmem:[#allocation4] sm:$0x1] %v96
    %v98 = vrot.slane %v67, 4
    %v99 = vadd.f32 %v67, %v98
    %v100 = vrot.slane %v99, 2
    %v101 = vadd.f32 %v99, %v100
    %v102 = vrot.slane %v101, 1
    %v103 = vadd.f32 %v101, %v102
    %v104 = vrot.slane %v68, 4
    %v105 = vadd.f32 %v68, %v104
    %v106 = vrot.slane %v105, 2
    %v107 = vadd.f32 %v105, %v106
    %v108 = vrot.slane %v107, 1
    %v109 = vadd.f32 %v107, %v108
    %v110 = vld [vmem:[#allocation3] sm:$0x1]
    %v111 = vmul.f32 %v103, %v109
    %v112 = vadd.f32 %v110, %v111
    %113 = vst [vmem:[#allocation3] sm:$0x1] %v112
    %v114 = vmax.f32 %v65, -44.0
    %v115 = vmin.f32 %v114, 44.0
    %v116 = vmul.f32 %v115, 1.442695
    %v117 = vpow.pop %v116
    %v118 = vsub.f32 0.0, %v115
    %v119 = vmul.f32 %v118, 1.442695
    %v120 = vpow.pop %v119
    %121 = vst [vmem:[#allocation7] sm:$0xff] %v117
    %122 = vst [vmem:[#allocation8] sm:$0xff] %v120
    %v123 = vld [vmem:[#allocation5] sm:$0x1]
    %v124 = vld [vmem:[#allocation7] sm:$0x1]
    %v125 = vld [vmem:[#allocation8] sm:$0x1]
    %v126 = vld [vmem:[#allocation6] sm:$0x1]
    %v127 = vsub.f32 1.0, %v126
    %v128 = vlaneseq
    %v129 = vshrl.u32 %v128, 7
    %v130 = vsub.s32 0, %v129
    %v131 = vrot.slane %v123, %v130
    %v132 = vsub.f32 %v65, %v131
    %v133 = vlaneseq
    %v134 = vshrl.u32 %v133, 7
    %v135 = vsub.s32 0, %v134
    %v136 = vrot.slane %v125, %v135
    %v137 = vmul.f32 %v117, %v136
    %v138 = vlaneseq
    %v139 = vshrl.u32 %v138, 7
    %v140 = vsub.s32 0, %v139
    %v141 = vrot.slane %v124, %v140
    %v142 = vmul.f32 %v120, %v141
    %v143 = vmin.f32 %v137, %v142
    %v144 = vmax.f32 %v132, 0.0
    %v145 = vadd.f32 %v143, 1.0
    %v146 = vlog2.pop %v145
    %v147 = vmul.f32 %v146, 0.6931472
    %v148 = vmul.f32 -0.5, %v143
    %v149 = vadd.f32 %v148, 1.0
    %v150 = vmul.f32 %v149, %v143
    %v151 = vand.u32 2147483647, %v143
    %vm152 = vcmp.lt.f32.partialorder %v151, 0.0004427343
    %v153 = vsel %vm152, %v150, %v147
    %v154 = vadd.f32 %v144, %v153
    %v155 = vmul.f32 %v68, %v154
    %v156 = vrot.slane %v155, 4
    %v157 = vadd.f32 %v155, %v156
    %v158 = vrot.slane %v157, 2
    %v159 = vadd.f32 %v157, %v158
    %v160 = vrot.slane %v159, 1
    %v161 = vadd.f32 %v159, %v160
    %v162 = vmul.f32 %v127, %v161
    %v163 = vadd.f32 %v162, 0.0
    %v164 = vld [vmem:[#allocation5 + $0x1] sm:$0x1]
    %v165 = vld [vmem:[#allocation7 + $0x1] sm:$0x1]
    %v166 = vld [vmem:[#allocation8 + $0x1] sm:$0x1]
    %v167 = vld [vmem:[#allocation6 + $0x1] sm:$0x1]
    %v168 = vsub.f32 1.0, %v167
    %v169 = vlaneseq
    %v170 = vshrl.u32 %v169, 7
    %v171 = vsub.s32 0, %v170
    %v172 = vrot.slane %v164, %v171
    %v173 = vsub.f32 %v65, %v172
    %v174 = vlaneseq
    %v175 = vshrl.u32 %v174, 7
    %v176 = vsub.s32 0, %v175
    %v177 = vrot.slane %v166, %v176
    %v178 = vmul.f32 %v117, %v177
    %v179 = vlaneseq
    %v180 = vshrl.u32 %v179, 7
    %v181 = vsub.s32 0, %v180
    %v182 = vrot.slane %v165, %v181
    %v183 = vmul.f32 %v120, %v182
    %v184 = vmin.f32 %v178, %v183
    %v185 = vmax.f32 %v173, 0.0
    %v186 = vadd.f32 %v184, 1.0
    %v187 = vlog2.pop %v186
    %v188 = vmul.f32 %v187, 0.6931472
    %v189 = vmul.f32 -0.5, %v184
    %v190 = vadd.f32 %v189, 1.0
    %v191 = vmul.f32 %v190, %v184
    %v192 = vand.u32 2147483647, %v184
    %vm193 = vcmp.lt.f32.partialorder %v192, 0.0004427343
    %v194 = vsel %vm193, %v191, %v188
    %v195 = vadd.f32 %v185, %v194
    %v196 = vmul.f32 %v68, %v195
    %v197 = vrot.slane %v196, 4
    %v198 = vadd.f32 %v196, %v197
    %v199 = vrot.slane %v198, 2
    %v200 = vadd.f32 %v198, %v199
    %v201 = vrot.slane %v200, 1
    %v202 = vadd.f32 %v200, %v201
    %v203 = vmul.f32 %v168, %v202
    %v204 = vadd.f32 %v163, %v203
    %v205 = vld [vmem:[#allocation5 + $0x2] sm:$0x1]
    %v206 = vld [vmem:[#allocation7 + $0x2] sm:$0x1]
    %v207 = vld [vmem:[#allocation8 + $0x2] sm:$0x1]
    %v208 = vld [vmem:[#allocation6 + $0x2] sm:$0x1]
    %v209 = vsub.f32 1.0, %v208
    %v210 = vlaneseq
    %v211 = vshrl.u32 %v210, 7
    %v212 = vsub.s32 0, %v211
    %v213 = vrot.slane %v205, %v212
    %v214 = vsub.f32 %v65, %v213
    %v215 = vlaneseq
    %v216 = vshrl.u32 %v215, 7
    %v217 = vsub.s32 0, %v216
    %v218 = vrot.slane %v207, %v217
    %v219 = vmul.f32 %v117, %v218
    %v220 = vlaneseq
    %v221 = vshrl.u32 %v220, 7
    %v222 = vsub.s32 0, %v221
    %v223 = vrot.slane %v206, %v222
    %v224 = vmul.f32 %v120, %v223
    %v225 = vmin.f32 %v219, %v224
    %v226 = vmax.f32 %v214, 0.0
    %v227 = vadd.f32 %v225, 1.0
    %v228 = vlog2.pop %v227
    %v229 = vmul.f32 %v228, 0.6931472
    %v230 = vmul.f32 -0.5, %v225
    %v231 = vadd.f32 %v230, 1.0
    %v232 = vmul.f32 %v231, %v225
    %v233 = vand.u32 2147483647, %v225
    %vm234 = vcmp.lt.f32.partialorder %v233, 0.0004427343
    %v235 = vsel %vm234, %v232, %v229
    %v236 = vadd.f32 %v226, %v235
    %v237 = vmul.f32 %v68, %v236
    %v238 = vrot.slane %v237, 4
    %v239 = vadd.f32 %v237, %v238
    %v240 = vrot.slane %v239, 2
    %v241 = vadd.f32 %v239, %v240
    %v242 = vrot.slane %v241, 1
    %v243 = vadd.f32 %v241, %v242
    %v244 = vmul.f32 %v209, %v243
    %v245 = vadd.f32 %v204, %v244
    %v246 = vld [vmem:[#allocation5 + $0x3] sm:$0x1]
    %v247 = vld [vmem:[#allocation7 + $0x3] sm:$0x1]
    %v248 = vld [vmem:[#allocation8 + $0x3] sm:$0x1]
    %v249 = vld [vmem:[#allocation6 + $0x3] sm:$0x1]
    %v250 = vsub.f32 1.0, %v249
    %v251 = vlaneseq
    %v252 = vshrl.u32 %v251, 7
    %v253 = vsub.s32 0, %v252
    %v254 = vrot.slane %v246, %v253
    %v255 = vsub.f32 %v65, %v254
    %v256 = vlaneseq
    %v257 = vshrl.u32 %v256, 7
    %v258 = vsub.s32 0, %v257
    %v259 = vrot.slane %v248, %v258
    %v260 = vmul.f32 %v117, %v259
    %v261 = vlaneseq
    %v262 = vshrl.u32 %v261, 7
    %v263 = vsub.s32 0, %v262
    %v264 = vrot.slane %v247, %v263
    %v265 = vmul.f32 %v120, %v264
    %v266 = vmin.f32 %v260, %v265
    %v267 = vmax.f32 %v255, 0.0
    %v268 = vadd.f32 %v266, 1.0
    %v269 = vlog2.pop %v268
    %v270 = vmul.f32 %v269, 0.6931472
    %v271 = vmul.f32 -0.5, %v266
    %v272 = vadd.f32 %v271, 1.0
    %v273 = vmul.f32 %v272, %v266
    %v274 = vand.u32 2147483647, %v266
    %vm275 = vcmp.lt.f32.partialorder %v274, 0.0004427343
    %v276 = vsel %vm275, %v273, %v270
    %v277 = vadd.f32 %v267, %v276
    %v278 = vmul.f32 %v68, %v277
    %v279 = vrot.slane %v278, 4
    %v280 = vadd.f32 %v278, %v279
    %v281 = vrot.slane %v280, 2
    %v282 = vadd.f32 %v280, %v281
    %v283 = vrot.slane %v282, 1
    %v284 = vadd.f32 %v282, %v283
    %v285 = vmul.f32 %v250, %v284
    %v286 = vadd.f32 %v245, %v285
    %v287 = vld [vmem:[#allocation5 + $0x4] sm:$0x1]
    %v288 = vld [vmem:[#allocation7 + $0x4] sm:$0x1]
    %v289 = vld [vmem:[#allocation8 + $0x4] sm:$0x1]
    %v290 = vld [vmem:[#allocation6 + $0x4] sm:$0x1]
    %v291 = vsub.f32 1.0, %v290
    %v292 = vlaneseq
    %v293 = vshrl.u32 %v292, 7
    %v294 = vsub.s32 0, %v293
    %v295 = vrot.slane %v287, %v294
    %v296 = vsub.f32 %v65, %v295
    %v297 = vlaneseq
    %v298 = vshrl.u32 %v297, 7
    %v299 = vsub.s32 0, %v298
    %v300 = vrot.slane %v289, %v299
    %v301 = vmul.f32 %v117, %v300
    %v302 = vlaneseq
    %v303 = vshrl.u32 %v302, 7
    %v304 = vsub.s32 0, %v303
    %v305 = vrot.slane %v288, %v304
    %v306 = vmul.f32 %v120, %v305
    %v307 = vmin.f32 %v301, %v306
    %v308 = vmax.f32 %v296, 0.0
    %v309 = vadd.f32 %v307, 1.0
    %v310 = vlog2.pop %v309
    %v311 = vmul.f32 %v310, 0.6931472
    %v312 = vmul.f32 -0.5, %v307
    %v313 = vadd.f32 %v312, 1.0
    %v314 = vmul.f32 %v313, %v307
    %v315 = vand.u32 2147483647, %v307
    %vm316 = vcmp.lt.f32.partialorder %v315, 0.0004427343
    %v317 = vsel %vm316, %v314, %v311
    %v318 = vadd.f32 %v308, %v317
    %v319 = vmul.f32 %v68, %v318
    %v320 = vrot.slane %v319, 4
    %v321 = vadd.f32 %v319, %v320
    %v322 = vrot.slane %v321, 2
    %v323 = vadd.f32 %v321, %v322
    %v324 = vrot.slane %v323, 1
    %v325 = vadd.f32 %v323, %v324
    %v326 = vmul.f32 %v291, %v325
    %v327 = vadd.f32 %v286, %v326
    %v328 = vld [vmem:[#allocation5 + $0x5] sm:$0x1]
    %v329 = vld [vmem:[#allocation7 + $0x5] sm:$0x1]
    %v330 = vld [vmem:[#allocation8 + $0x5] sm:$0x1]
    %v331 = vld [vmem:[#allocation6 + $0x5] sm:$0x1]
    %v332 = vsub.f32 1.0, %v331
    %v333 = vlaneseq
    %v334 = vshrl.u32 %v333, 7
    %v335 = vsub.s32 0, %v334
    %v336 = vrot.slane %v328, %v335
    %v337 = vsub.f32 %v65, %v336
    %v338 = vlaneseq
    %v339 = vshrl.u32 %v338, 7
    %v340 = vsub.s32 0, %v339
    %v341 = vrot.slane %v330, %v340
    %v342 = vmul.f32 %v117, %v341
    %v343 = vlaneseq
    %v344 = vshrl.u32 %v343, 7
    %v345 = vsub.s32 0, %v344
    %v346 = vrot.slane %v329, %v345
    %v347 = vmul.f32 %v120, %v346
    %v348 = vmin.f32 %v342, %v347
    %v349 = vmax.f32 %v337, 0.0
    %v350 = vadd.f32 %v348, 1.0
    %v351 = vlog2.pop %v350
    %v352 = vmul.f32 %v351, 0.6931472
    %v353 = vmul.f32 -0.5, %v348
    %v354 = vadd.f32 %v353, 1.0
    %v355 = vmul.f32 %v354, %v348
    %v356 = vand.u32 2147483647, %v348
    %vm357 = vcmp.lt.f32.partialorder %v356, 0.0004427343
    %v358 = vsel %vm357, %v355, %v352
    %v359 = vadd.f32 %v349, %v358
    %v360 = vmul.f32 %v68, %v359
    %v361 = vrot.slane %v360, 4
    %v362 = vadd.f32 %v360, %v361
    %v363 = vrot.slane %v362, 2
    %v364 = vadd.f32 %v362, %v363
    %v365 = vrot.slane %v364, 1
    %v366 = vadd.f32 %v364, %v365
    %v367 = vmul.f32 %v332, %v366
    %v368 = vadd.f32 %v327, %v367
    %v369 = vld [vmem:[#allocation5 + $0x6] sm:$0x1]
    %v370 = vld [vmem:[#allocation7 + $0x6] sm:$0x1]
    %v371 = vld [vmem:[#allocation8 + $0x6] sm:$0x1]
    %v372 = vld [vmem:[#allocation6 + $0x6] sm:$0x1]
    %v373 = vsub.f32 1.0, %v372
    %v374 = vlaneseq
    %v375 = vshrl.u32 %v374, 7
    %v376 = vsub.s32 0, %v375
    %v377 = vrot.slane %v369, %v376
    %v378 = vsub.f32 %v65, %v377
    %v379 = vlaneseq
    %v380 = vshrl.u32 %v379, 7
    %v381 = vsub.s32 0, %v380
    %v382 = vrot.slane %v371, %v381
    %v383 = vmul.f32 %v117, %v382
    %v384 = vlaneseq
    %v385 = vshrl.u32 %v384, 7
    %v386 = vsub.s32 0, %v385
    %v387 = vrot.slane %v370, %v386
    %v388 = vmul.f32 %v120, %v387
    %v389 = vmin.f32 %v383, %v388
    %v390 = vmax.f32 %v378, 0.0
    %v391 = vadd.f32 %v389, 1.0
    %v392 = vlog2.pop %v391
    %v393 = vmul.f32 %v392, 0.6931472
    %v394 = vmul.f32 -0.5, %v389
    %v395 = vadd.f32 %v394, 1.0
    %v396 = vmul.f32 %v395, %v389
    %v397 = vand.u32 2147483647, %v389
    %vm398 = vcmp.lt.f32.partialorder %v397, 0.0004427343
    %v399 = vsel %vm398, %v396, %v393
    %v400 = vadd.f32 %v390, %v399
    %v401 = vmul.f32 %v68, %v400
    %v402 = vrot.slane %v401, 4
    %v403 = vadd.f32 %v401, %v402
    %v404 = vrot.slane %v403, 2
    %v405 = vadd.f32 %v403, %v404
    %v406 = vrot.slane %v405, 1
    %v407 = vadd.f32 %v405, %v406
    %v408 = vmul.f32 %v373, %v407
    %v409 = vadd.f32 %v368, %v408
    %v410 = vld [vmem:[#allocation5 + $0x7] sm:$0x1]
    %v411 = vld [vmem:[#allocation7 + $0x7] sm:$0x1]
    %v412 = vld [vmem:[#allocation8 + $0x7] sm:$0x1]
    %v413 = vld [vmem:[#allocation6 + $0x7] sm:$0x1]
    %v414 = vsub.f32 1.0, %v413
    %v415 = vlaneseq
    %v416 = vshrl.u32 %v415, 7
    %v417 = vsub.s32 0, %v416
    %v418 = vrot.slane %v410, %v417
    %v419 = vsub.f32 %v65, %v418
    %v420 = vlaneseq
    %v421 = vshrl.u32 %v420, 7
    %v422 = vsub.s32 0, %v421
    %v423 = vrot.slane %v412, %v422
    %v424 = vmul.f32 %v117, %v423
    %v425 = vlaneseq
    %v426 = vshrl.u32 %v425, 7
    %v427 = vsub.s32 0, %v426
    %v428 = vrot.slane %v411, %v427
    %v429 = vmul.f32 %v120, %v428
    %v430 = vmin.f32 %v424, %v429
    %v431 = vmax.f32 %v419, 0.0
    %v432 = vadd.f32 %v430, 1.0
    %v433 = vlog2.pop %v432
    %v434 = vmul.f32 %v433, 0.6931472
    %v435 = vmul.f32 -0.5, %v430
    %v436 = vadd.f32 %v435, 1.0
    %v437 = vmul.f32 %v436, %v430
    %v438 = vand.u32 2147483647, %v430
    %vm439 = vcmp.lt.f32.partialorder %v438, 0.0004427343
    %v440 = vsel %vm439, %v437, %v434
    %v441 = vadd.f32 %v431, %v440
    %v442 = vmul.f32 %v68, %v441
    %v443 = vrot.slane %v442, 4
    %v444 = vadd.f32 %v442, %v443
    %v445 = vrot.slane %v444, 2
    %v446 = vadd.f32 %v444, %v445
    %v447 = vrot.slane %v446, 1
    %v448 = vadd.f32 %v446, %v447
    %v449 = vmul.f32 %v414, %v448
    %v450 = vadd.f32 %v409, %v449
    %v451 = vld [vmem:[#allocation2] sm:$0x1]
    %v452 = vadd.f32 %v451, %v450
    %453 = vst [vmem:[#allocation2] sm:$0x1] %v452
    // Predicated region
    $region22: #{tpu_custom_call.1} parent=1 // pred_check
      %p454 = pneg %p48
    $region23: #{tpu_custom_call.1} parent=1 // pred_check_branch
      %456 = sbr.rel (%p454) target = $region25
    $region24: #{tpu_custom_call.1} parent=1 // pred_region
      %v457 = vld [vmem:[#allocation2] sm:$0x1]
      %vm458 = vcmask 1040384
      %v459 = vsel %vm458, %v457, 0.0
      %460 = vadd.xlane.f32.xlu0 %v459
      %v461 = vpop.xlane.xlu0 %460
      %v462 = vrot.slane %v461, 4
      %v463 = vadd.f32 %v461, %v462
      %v464 = vrot.slane %v463, 2
      %v465 = vadd.f32 %v463, %v464
      %v466 = vrot.slane %v465, 1
      %v467 = vadd.f32 %v465, %v466
      %s468 = vtos %v467
      %v469 = vstv %s468
      %vm470 = vcmask 0
      %471 = vst.msk [vmem:[#allocation14] sm:$0x1] %vm470, %v469
      %v472 = vld [vmem:[#allocation3] sm:$0x1]
      %v473 = vsel %vm458, %v472, 0.0
      %474 = vadd.xlane.f32.xlu0 %v473
      %v475 = vpop.xlane.xlu0 %474
      %v476 = vrot.slane %v475, 4
      %v477 = vadd.f32 %v475, %v476
      %v478 = vrot.slane %v477, 2
      %v479 = vadd.f32 %v477, %v478
      %v480 = vrot.slane %v479, 1
      %v481 = vadd.f32 %v479, %v480
      %s482 = vtos %v481
      %v483 = vstv %s482
      %484 = vst.msk [vmem:[#allocation15] sm:$0x1] %vm470, %v483
      %v485 = vld [vmem:[#allocation4] sm:$0x1]
      %v486 = vsel %vm458, %v485, 0.0
      %487 = vadd.xlane.f32.xlu0 %v486
      %v488 = vpop.xlane.xlu0 %487
      %v489 = vrot.slane %v488, 4
      %v490 = vadd.f32 %v488, %v489
      %v491 = vrot.slane %v490, 2
      %v492 = vadd.f32 %v490, %v491
      %v493 = vrot.slane %v492, 1
      %v494 = vadd.f32 %v492, %v493
      %s495 = vtos %v494
      %v496 = vstv %s495
      %497 = vst.msk [vmem:[#allocation17] sm:$0x1] %vm470, %v496
    $region25: #{tpu_custom_call.1} parent=1 // pred_fallthru
      _
    // Predicated region
    $region26: #{tpu_custom_call.1} parent=1 // pred_check
      _
    $region27: #{tpu_custom_call.1} parent=1 // pred_check_branch
      %499 = sbr.rel (0) target = $region29
    $region28: #{tpu_custom_call.1} parent=1 // pred_region
      %s501 = ssub.s32 16, 16
      %502 = vsyncadd [#allocation11], %s501
      %s504 = sshll.u32 [#allocation14], 4
      %s505 = int_to_ptr.vmem [resolvable:$true] %s504
      %507 = dma.vmem_to_hbm [thread:$0]  %s505, 16, %s2, [#allocation11]
    $region29: #{tpu_custom_call.1} parent=1 // pred_fallthru
      _
    // Predicated region
    $region30: #{tpu_custom_call.1} parent=1 // pred_check
      _
    $region31: #{tpu_custom_call.1} parent=1 // pred_check_branch
      %509 = sbr.rel (0) target = $region33
    $region32: #{tpu_custom_call.1} parent=1 // pred_region
      %s511 = ssub.s32 16, 16
      %512 = vsyncadd [#allocation16], %s511
      %s514 = sshll.u32 [#allocation15], 4
      %s515 = int_to_ptr.vmem [resolvable:$true] %s514
      %517 = dma.vmem_to_hbm [thread:$0]  %s515, 16, %s3, [#allocation16]
    $region33: #{tpu_custom_call.1} parent=1 // pred_fallthru
      _
    // Predicated region
    $region34: #{tpu_custom_call.1} parent=1 // pred_check
      _
    $region35: #{tpu_custom_call.1} parent=1 // pred_check_branch
      %519 = sbr.rel (0) target = $region37
    $region36: #{tpu_custom_call.1} parent=1 // pred_region
      %s521 = ssub.s32 16, 16
      %522 = vsyncadd [#allocation16], %s521
      %s524 = sshll.u32 [#allocation17], 4
      %s525 = int_to_ptr.vmem [resolvable:$true] %s524
      %527 = dma.vmem_to_hbm [thread:$0]  %s525, 16, %s4, [#allocation16]
    $region37: #{tpu_custom_call.1} parent=1 // pred_fallthru
      _
    // Predicated region
    $region38: #{tpu_custom_call.1} parent=1 // pred_check
      _
    $region39: #{tpu_custom_call.1} parent=1 // pred_check_branch
      %529 = sbr.rel (0) target = $region41
    $region40: #{tpu_custom_call.1} parent=1 // pred_region
      %530 = dma.done [#allocation11], 16
    $region41: #{tpu_custom_call.1} parent=1 // pred_fallthru
      _
    // Predicated region
    $region42: #{tpu_custom_call.1} parent=1 // pred_check
      _
    $region43: #{tpu_custom_call.1} parent=1 // pred_check_branch
      %532 = sbr.rel (0) target = $region45
    $region44: #{tpu_custom_call.1} parent=1 // pred_region
      %533 = dma.done [#allocation16], 16
    $region45: #{tpu_custom_call.1} parent=1 // pred_fallthru
      _
    // Predicated region
    $region46: #{tpu_custom_call.1} parent=1 // pred_check
      _
    $region47: #{tpu_custom_call.1} parent=1 // pred_check_branch
      %535 = sbr.rel (0) target = $region49
    $region48: #{tpu_custom_call.1} parent=1 // pred_region
      %536 = dma.done [#allocation16], 16
    $region49: #{tpu_custom_call.1} parent=1 // pred_fallthru
      _
    %537 = vsyncpa [#allocation10], 1
    %538 = vsyncpa [#allocation13], 1
    %539 = vsyncpa [#allocation11], 1
    %540 = vsyncpa [#allocation16], 1

</llo_original>
